<compile_context>
chip_gen: v7x
topology: tpu7x:2x2x1
jax: 0.10.0
libtpu: 0.0.40
codegen_flags: <defaults>
</compile_context>

<pallas_src>
import numpy as np
import jax
import jax.numpy as jnp
from jax.experimental import pallas as pl
from jax.experimental.pallas import tpu as pltpu

_LANE = 128
_MIN_STEPS = 8                 # >= 4 pipeline steps per TensorCore (v7x: 2 TCs)
_MIN_BLOCK_BYTES = 256 * 1024  # don't shrink blocks below this to add steps


def _cdiv(a, b):
    return -(-a // b)


def _make_pe(output_dim: int, maxlen: int) -> jnp.ndarray:
    """Sinusoidal table identical to the PyTorch initializer (f32, (maxlen, D))."""
    pos = np.arange(maxlen)[:, None].astype(np.float64)
    i = np.arange(output_dim)[None, :]
    angle = pos / np.power(10000.0, 2.0 * (i // 2) / output_dim)
    pe = np.empty((maxlen, output_dim), dtype=np.float64)
    pe[:, 0::2] = np.sin(angle[:, 0::2])
    pe[:, 1::2] = np.cos(angle[:, 1::2])
    return jnp.asarray(pe, dtype=jnp.float32)


def _target_block_bytes() -> int:
    """~4 MiB blocks on v6e/v7x (32 MiB scoped-VMEM default), ~2 MiB elsewhere
    (v5e's default is only 16 MiB).  <=6 live buffers x block stays well inside
    the default limit, so no vmem_limit_bytes override is required."""
    try:
        kind = jax.devices()[0].device_kind.lower()
    except Exception:
        kind = ""
    if "v6" in kind or "v7" in kind:
        return 4 << 20
    return 2 << 20


def _pick_row_tile(extent: int, limit: int, sub: int) -> int:
    """Largest multiple of `sub` <= limit, preferring exact divisors of extent
    (so no boundary block is masked).  Always returns a multiple of `sub`."""
    top = max(sub, (limit // sub) * sub)
    for cand in range(top, sub - 1, -sub):
        if extent % cand == 0:
            return cand
    return top


def _plan_lane_dense(B: int, R: int, row_bytes: int, sub: int):
    """Pick (tB, tR) blocks for arrays viewed as (B, R, 128)."""
    target = _target_block_bytes()
    total_bytes = B * R * row_bytes
    steps = _cdiv(total_bytes, target)
    if total_bytes >= _MIN_STEPS * _MIN_BLOCK_BYTES:
        steps = max(steps, _MIN_STEPS)        # keep both v7x TCs' pipelines fed
    block_rows = max(1, _cdiv(B * R, steps))
    if block_rows >= R:
        # Per-batch slab is small: fold batch items into the block so each grid
        # step still moves ~target bytes (no thousands of sub-MiB steps).
        tB = max(1, min(B, block_rows // R))
        return tB, R
    return 1, _pick_row_tile(R, block_rows, sub)


def _plan_seq_tile(B: int, S: int, row_bytes: int, sub: int) -> int:
    """Pick tS (always a multiple of `sub`) for the (tS, D) fallback blocks."""
    target = _target_block_bytes()
    total_bytes = B * S * row_bytes
    steps = _cdiv(total_bytes, target)
    if total_bytes >= _MIN_STEPS * _MIN_BLOCK_BYTES:
        steps = max(steps, _MIN_STEPS)
    rows = max(1, min(S, _cdiv(B * S, steps)))
    return _pick_row_tile(S, rows, sub)


def _add_pe_kernel(x_ref, pe_ref, o_ref):
    # One body for every path: 2-D (batch squeezed) or 3-D (batch-tiled) x/out
    # blocks; the 2-D pe block broadcasts over the leading batch dim if present.
    o_ref[...] = (x_ref[...] + pe_ref[...]).astype(o_ref.dtype)


def _lane_dense_call(x3, pe_rows, tB, tR):
    B, R, _ = x3.shape
    grid = (_cdiv(R, tR), _cdiv(B, tB))   # row tiles outer, batch inner:
    if tB == 1:                           # pe block index is constant across the
        xo_block = (None, tR, _LANE)      # inner loop -> stays VMEM-resident.
    else:
        xo_block = (tB, tR, _LANE)
    return pl.pallas_call(
        _add_pe_kernel,
        out_shape=jax.ShapeDtypeStruct(x3.shape, x3.dtype),
        grid_spec=pltpu.PrefetchScalarGridSpec(
            num_scalar_prefetch=0,
            grid=grid,
            in_specs=[
                pl.BlockSpec(xo_block, lambda r, b: (b, r, 0)),
                pl.BlockSpec((tR, _LANE), lambda r, b: (r, 0)),
            ],
            out_specs=pl.BlockSpec(xo_block, lambda r, b: (b, r, 0)),
        ),
        compiler_params=pltpu.CompilerParams(
            dimension_semantics=("parallel", "parallel")),
    )(x3, pe_rows)


def _seq_tiled_call(x, pe_full, tS):
    B, S, D = x.shape
    grid = (_cdiv(S, tS), B)
    return pl.pallas_call(
        _add_pe_kernel,
        out_shape=jax.ShapeDtypeStruct((B, S, D), x.dtype),
        grid_spec=pltpu.PrefetchScalarGridSpec(
            num_scalar_prefetch=0,
            grid=grid,
            in_specs=[
                pl.BlockSpec((None, tS, D), lambda s, b: (b, s, 0)),
                pl.BlockSpec((tS, D), lambda s, b: (s, 0)),
            ],
            out_specs=pl.BlockSpec((None, tS, D), lambda s, b: (b, s, 0)),
        ),
        compiler_params=pltpu.CompilerParams(
            dimension_semantics=("parallel", "parallel")),
    )(x, pe_full)


def positional_encoding(x, pe, pe_flat=None):
    """x: (B, S, D); pe: (maxlen, D) f32 table; pe_flat: optional pre-flattened
    (maxlen*D//128, 128) view of pe (enables the zero-copy pe path)."""
    B, S, D = x.shape
    maxlen, pe_d = pe.shape
    if pe_d != D:
        raise ValueError(f"pe dim {pe_d} != input dim {D}")
    if S > maxlen:
        raise ValueError(f"sequence length {S} exceeds maxlen {maxlen}")

    x_item = x.dtype.itemsize
    pe_item = pe.dtype.itemsize
    plan_item = max(x_item, pe_item)                 # size blocks for widest stream
    sub = max(8, 32 // min(x_item, pe_item))         # 8 f32 / 16 bf16 / 32 int8

    if (S * D) % _LANE == 0:
        # ---- lane-dense path: view trailing dims as (R, 128) rows ----
        R = (S * D) // _LANE
        tB, tR = _plan_lane_dense(B, R, _LANE * plan_item, sub)
        x3 = x.reshape(B, R, _LANE)                  # contiguous -> free bitcast
        if pe_flat is not None and (tR % sub == 0 or tR == pe_flat.shape[0]):
            pe_rows = pe_flat                        # zero-copy: first R rows == pe[:S]
        else:
            # Corner case (tiny R below the sublane multiple, or maxlen*D % 128
            # != 0): pay a one-off tiny slice so block shapes stay legal.
            pe_rows = pe[:S, :].reshape(R, _LANE)
        out = _lane_dense_call(x3, pe_rows, tB, tR)
        return out.reshape(B, S, D)

    # ---- fallback: S*D not a lane multiple; tile the sequence axis ----
    # TODO(synk): pad D up to 128 in the caller if D < 128 ever becomes a hot
    # path -- stores here are lane-masked when D % 128 != 0.
    tS = _plan_seq_tile(B, S, D * plan_item, sub)
    return _seq_tiled_call(x, pe, tS)


class PositionalEncoding:
    """JAX/Pallas analogue of the PyTorch module: the sinusoid table (and its
    lane-dense flattened view) is built once at init so the hot path never
    re-slices or re-materializes it."""

    def __init__(self, output_dim, maxlen=6000):
        self.output_dim = output_dim
        self.maxlen = maxlen
        self.pe = _make_pe(output_dim, maxlen)                      # (maxlen, D) f32
        if (maxlen * output_dim) % _LANE == 0:
            self.pe_flat = self.pe.reshape((maxlen * output_dim) // _LANE, _LANE)
        else:
            self.pe_flat = None

    def __call__(self, x, mask=None):
        return positional_encoding(x, self.pe, self.pe_flat)


if __name__ == "__main__":
    key = jax.random.PRNGKey(0)

    # 1) Small shape implied by the module's forward (batch, seq, hidden).
    B, S, D, MAXLEN = 2, 8, 32, 64
    enc = PositionalEncoding(output_dim=D, maxlen=MAXLEN)
    x = jax.random.normal(key, (B, S, D), dtype=jnp.float32)
    out = jax.block_until_ready(enc(x))
    ref = x + enc.pe[:S, :][None, :, :]
    np.testing.assert_allclose(np.asarray(out), np.asarray(ref), rtol=1e-6, atol=1e-6)

    # 2) Larger shape exercising the zero-copy pe path, row tiling and the
    #    >= 8-step grid (>= 4 pipeline steps per v7x TensorCore).
    B2, S2, D2, MAXLEN2 = 2, 1024, 384, 2048
    enc2 = PositionalEncoding(output_dim=D2, maxlen=MAXLEN2)
    x2 = jax.random.normal(jax.random.PRNGKey(0), (B2, S2, D2), dtype=jnp.float32)
    out2 = jax.block_until_ready(enc2(x2))
    ref2 = x2 + enc2.pe[:S2, :][None, :, :]
    np.testing.assert_allclose(np.asarray(out2), np.asarray(ref2), rtol=1e-6, atol=1e-6)

    # 3) S*D % 128 != 0 exercises the sequence-tiled fallback path.
    B3, S3, D3, MAXLEN3 = 3, 10, 48, 50
    enc3 = PositionalEncoding(output_dim=D3, maxlen=MAXLEN3)
    x3 = jax.random.normal(jax.random.PRNGKey(0), (B3, S3, D3), dtype=jnp.float32)
    out3 = jax.block_until_ready(enc3(x3))
    ref3 = x3 + enc3.pe[:S3, :][None, :, :]
    np.testing.assert_allclose(np.asarray(out3), np.asarray(ref3), rtol=1e-6, atol=1e-6)

    print("KERNEL_OK")
</pallas_src>

<mosaic_0001>
module attributes {stable_mosaic.version = 11 : i64} {
  func.func @_add_pe_kernel(%arg0: i32, %arg1: i32, %arg2: memref<2x2x128xf32, #tpu.memory_space<vmem>>, %arg3: memref<2x128xf32, #tpu.memory_space<vmem>>, %arg4: memref<2x2x128xf32, #tpu.memory_space<vmem>>) attributes {dimension_semantics = [#tpu.dimension_semantics<parallel>, #tpu.dimension_semantics<parallel>], iteration_bounds = array<i64: 1, 1>, scalar_prefetch = 0 : i64, scratch_operands = 0 : i64, tpu.core_type = #tpu.core_type<tc>, window_params = [{transform_indices = @transform_0, window_bounds = array<i64: 2, 2, 128>}, {transform_indices = @transform_1, window_bounds = array<i64: 2, 128>}, {transform_indices = @transform_2, window_bounds = array<i64: 2, 2, 128>}]} {
    %c0 = arith.constant 0 : index
    %c0_0 = arith.constant 0 : index
    %c0_1 = arith.constant 0 : index
    %0 = vector.load %arg2[%c0, %c0_0, %c0_1] : memref<2x2x128xf32, #tpu.memory_space<vmem>>, vector<2x2x128xf32>
    %c0_2 = arith.constant 0 : index
    %c0_3 = arith.constant 0 : index
    %1 = vector.load %arg3[%c0_2, %c0_3] : memref<2x128xf32, #tpu.memory_space<vmem>>, vector<2x128xf32>
    %2 = vector.shape_cast %1 : vector<2x128xf32> to vector<1x2x128xf32>
    %3 = vector.broadcast %2 : vector<1x2x128xf32> to vector<2x2x128xf32>
    %4 = arith.addf %0, %3 : vector<2x2x128xf32>
    %c0_4 = arith.constant 0 : index
    %c0_5 = arith.constant 0 : index
    %c0_6 = arith.constant 0 : index
    %5 = vector.load %arg4[%c0_4, %c0_5, %c0_6] : memref<2x2x128xf32, #tpu.memory_space<vmem>>, vector<2x2x128xf32>
    tpu.vector_store %arg4[%c0_4, %c0_5, %c0_6], %4 {strides = array<i32>} : memref<2x2x128xf32, #tpu.memory_space<vmem>>, vector<2x2x128xf32>,
    return
  }
  func.func @transform_0(%arg0: i32, %arg1: i32) -> (i32, i32, i32) {
    %c0_i32 = arith.constant 0 : i32
    %c0_i32_0 = arith.constant 0 : i32
    return %arg1, %arg0, %c0_i32 : i32, i32, i32
  }
  func.func @transform_1(%arg0: i32, %arg1: i32) -> (i32, i32) {
    %c0_i32 = arith.constant 0 : i32
    %c0_i32_0 = arith.constant 0 : i32
    return %arg0, %c0_i32 : i32, i32
  }
  func.func @transform_2(%arg0: i32, %arg1: i32) -> (i32, i32, i32) {
    %c0_i32 = arith.constant 0 : i32
    %c0_i32_0 = arith.constant 0 : i32
    return %arg1, %arg0, %c0_i32 : i32, i32, i32
  }
}

</mosaic_0001>

<llo_original>
// kernel: tpu_custom_call.1
$region0: #{tpu_custom_call.1}
  #allocation0 [shape = 'u32[]', space=smem, size = 0x4, offset = 0x4, fixed_abs, tag = 'smem constant byte address 0x4 - core index']
  #allocation1 [shape = 'u32[144,128]{1,0:T(1,128)}', space=vmem, size = 0x12000, scoped, tag = 'internal scratch']
  %s0 = inlined_call_operand.hbm [shape: f32[2,2,128], index: 0, kind: input, shape index: {}]
  %s1 = inlined_call_operand.vmem [shape: f32[2,128], index: 1, kind: input, shape index: {}]
  %s2 = inlined_call_operand.hbm [shape: f32[2,2,128], index: 2, kind: output, shape index: {}]
  %s3 = sld [smem:[#allocation0]]
  $region22: #{tpu_custom_call.1} parent=0
    _
  %s5 = ssub.s32 1, %s3
  %s6 = scalar_select 0, %s5, %s3
  $region1: #{tpu_custom_call.1} parent=0
    #allocation2 [shape = 'u8[2048]{0}', space=vmem, size = 0x800, scoped, tag = 'input window, operand 0, single buffered']
    #allocation3 [shape = 's32[1]{0}', space=sflag, size = 0x4, scoped, tag = 'scoped memory for tpu_custom_call.1']
    #allocation4 [shape = 's32[1]{0}', space=sflag, size = 0x4, scoped, tag = 'scoped memory for tpu_custom_call.1']
    #allocation5 [shape = 'u8[2048]{0}', space=vmem, size = 0x800, scoped, tag = 'output window, operand 0, single buffered']
    %7 = vsyncpa [#allocation3], 0
    %8 = vsyncpa [#allocation4], 0
    // Predicated region
    $region2: #{tpu_custom_call.1} parent=1 // pred_check
      _
    $region3: #{tpu_custom_call.1} parent=1 // pred_check_branch
      %10 = sbr.rel (0) target = $region5
    $region4: #{tpu_custom_call.1} parent=1 // pred_region
      %s12 = ssub.s32 64, 64
      %13 = vsyncadd [#allocation3], %s12
      %s14 = sshll.u32 [#allocation2], 4
      %s15 = int_to_ptr.vmem [resolvable:$true] %s14
      %20 = dma.hbm_to_vmem [thread:$0]  %s0, 64, %s15, [#allocation3], 32, 32, 2
    $region5: #{tpu_custom_call.1} parent=1 // pred_fallthru
      _
    // Predicated region
    $region6: #{tpu_custom_call.1} parent=1 // pred_check
      _
    $region7: #{tpu_custom_call.1} parent=1 // pred_check_branch
      %22 = sbr.rel (0) target = $region9
    $region8: #{tpu_custom_call.1} parent=1 // pred_region
      _
    $region9: #{tpu_custom_call.1} parent=1 // pred_fallthru
      _
    // Predicated region
    $region10: #{tpu_custom_call.1} parent=1 // pred_check
      _
    $region11: #{tpu_custom_call.1} parent=1 // pred_check_branch
      %24 = sbr.rel (0) target = $region13
    $region12: #{tpu_custom_call.1} parent=1 // pred_region
      %25 = dma.done [#allocation3], 64
    $region13: #{tpu_custom_call.1} parent=1 // pred_fallthru
      _
    %v26 = vld [vmem:[#allocation2] sm:$0x3]
    %v27 = vld [vmem:[#allocation2 + $0x2] sm:$0x3]
    %v28 = vld [vmem:[%s1] sm:$0x3]
    %v29 = vadd.f32 %v26, %v28
    %v30 = vadd.f32 %v27, %v28
    %31 = vst [vmem:[#allocation5] sm:$0x3] %v29
    %32 = vst [vmem:[#allocation5 + $0x2] sm:$0x3] %v30
    // Predicated region
    $region14: #{tpu_custom_call.1} parent=1 // pred_check
      _
    $region15: #{tpu_custom_call.1} parent=1 // pred_check_branch
      %34 = sbr.rel (0) target = $region17
    $region16: #{tpu_custom_call.1} parent=1 // pred_region
      %s36 = ssub.s32 64, 64
      %37 = vsyncadd [#allocation4], %s36
      %s38 = sshll.u32 [#allocation5], 4
      %s39 = int_to_ptr.vmem [resolvable:$true] %s38
      %44 = dma.vmem_to_hbm [thread:$0]  %s39, 64, %s2, [#allocation4], 32, 32, 2
    $region17: #{tpu_custom_call.1} parent=1 // pred_fallthru
      _
    // Predicated region
    $region18: #{tpu_custom_call.1} parent=1 // pred_check
      _
    $region19: #{tpu_custom_call.1} parent=1 // pred_check_branch
      %46 = sbr.rel (0) target = $region21
    $region20: #{tpu_custom_call.1} parent=1 // pred_region
      %47 = dma.done [#allocation4], 64
    $region21: #{tpu_custom_call.1} parent=1 // pred_fallthru
      _
    %48 = vsyncpa [#allocation3], 1
    %49 = vsyncpa [#allocation4], 1

</llo_original>
